<compile_context>
chip_gen: v7x
topology: tpu7x:2x2x1
jax: 0.10.0
libtpu: 0.0.40
codegen_flags: <defaults>
</compile_context>

<pallas_src>
import functools

import jax
import jax.numpy as jnp
from jax.experimental import pallas as pl
from jax.experimental.pallas import tpu as pltpu


# -------------------------- tiling helpers ---------------------------------

_MAX_TILE_R = 512   # sublane-dim tile (multiple of 8)
_MAX_TILE_C = 512   # lane-dim tile (multiple of 128)


def _tile_dims(shape):
    R, C = shape
    tr = R if R <= _MAX_TILE_R else _MAX_TILE_R
    tc = C if C <= _MAX_TILE_C else _MAX_TILE_C
    return tr, tc


# ----------------------------- kernels -------------------------------------

def _mask_kernel(idx_ref, lam_ref, damp_ref, mask_ref):
    # 1 - (damp >= 0) * (lambda_[i] <= damp), as a single select.
    lam_i = lam_ref[idx_ref[0]]                     # scalar read from SMEM
    damp = damp_ref[...]
    zero_out = (damp >= 0.0) & (lam_i <= damp)
    mask_ref[...] = jnp.where(zero_out, 0.0, 1.0).astype(mask_ref.dtype)


def _loss_kernel(idx_ref, lam_ref, damp_ref, loss_ref, out_ref):
    # (lambda_[i] - damp) * loss
    lam_i = lam_ref[idx_ref[0]]
    out_ref[...] = ((lam_i - damp_ref[...]) * loss_ref[...]).astype(out_ref.dtype)


def _mask_loss_kernel(idx_ref, lam_ref, damp_ref, loss_ref, mask_ref, out_ref):
    # Fused: damp is loaded once, both outputs produced in one launch.
    lam_i = lam_ref[idx_ref[0]]
    damp = damp_ref[...]
    zero_out = (damp >= 0.0) & (lam_i <= damp)
    mask_ref[...] = jnp.where(zero_out, 0.0, 1.0).astype(mask_ref.dtype)
    out_ref[...] = ((lam_i - damp) * loss_ref[...]).astype(out_ref.dtype)


def _make_positive_kernel(lam_ref, out_ref):
    # lambda_ * (lambda_ > 0)
    lam = lam_ref[...]
    out_ref[...] = jnp.where(lam > 0.0, lam, jnp.zeros_like(lam))


# ------------------------- jitted pallas wrappers ---------------------------

@jax.jit
def _get_mask_jit(lambda_, idx, damp):
    R, C = damp.shape
    tr, tc = _tile_dims((R, C))
    grid = (pl.cdiv(R, tr), pl.cdiv(C, tc))
    return pl.pallas_call(
        _mask_kernel,
        out_shape=jax.ShapeDtypeStruct((R, C), jnp.float32),
        grid_spec=pltpu.PrefetchScalarGridSpec(
            num_scalar_prefetch=2,
            grid=grid,
            in_specs=[pl.BlockSpec((tr, tc), lambda i, j, idx_r, lam_r: (i, j))],
            out_specs=pl.BlockSpec((tr, tc), lambda i, j, idx_r, lam_r: (i, j)),
        ),
        compiler_params=pltpu.CompilerParams(
            dimension_semantics=("parallel", "parallel")),
    )(idx, lambda_, damp)


@jax.jit
def _get_loss_jit(lambda_, idx, damp, loss):
    R, C = damp.shape
    tr, tc = _tile_dims((R, C))
    grid = (pl.cdiv(R, tr), pl.cdiv(C, tc))
    return pl.pallas_call(
        _loss_kernel,
        out_shape=jax.ShapeDtypeStruct((R, C), jnp.float32),
        grid_spec=pltpu.PrefetchScalarGridSpec(
            num_scalar_prefetch=2,
            grid=grid,
            in_specs=[pl.BlockSpec((tr, tc), lambda i, j, idx_r, lam_r: (i, j)),
                      pl.BlockSpec((tr, tc), lambda i, j, idx_r, lam_r: (i, j))],
            out_specs=pl.BlockSpec((tr, tc), lambda i, j, idx_r, lam_r: (i, j)),
        ),
        compiler_params=pltpu.CompilerParams(
            dimension_semantics=("parallel", "parallel")),
    )(idx, lambda_, damp, loss)


@jax.jit
def _get_mask_and_loss_jit(lambda_, idx, damp, loss):
    R, C = damp.shape
    tr, tc = _tile_dims((R, C))
    grid = (pl.cdiv(R, tr), pl.cdiv(C, tc))
    return pl.pallas_call(
        _mask_loss_kernel,
        out_shape=(jax.ShapeDtypeStruct((R, C), jnp.float32),
                   jax.ShapeDtypeStruct((R, C), jnp.float32)),
        grid_spec=pltpu.PrefetchScalarGridSpec(
            num_scalar_prefetch=2,
            grid=grid,
            in_specs=[pl.BlockSpec((tr, tc), lambda i, j, idx_r, lam_r: (i, j)),
                      pl.BlockSpec((tr, tc), lambda i, j, idx_r, lam_r: (i, j))],
            out_specs=[pl.BlockSpec((tr, tc), lambda i, j, idx_r, lam_r: (i, j)),
                       pl.BlockSpec((tr, tc), lambda i, j, idx_r, lam_r: (i, j))],
        ),
        compiler_params=pltpu.CompilerParams(
            dimension_semantics=("parallel", "parallel")),
    )(idx, lambda_, damp, loss)


@jax.jit
def _make_positive_jit(lambda_):
    count = lambda_.shape[0]
    lam2d = lambda_.reshape(1, count)
    out = pl.pallas_call(
        _make_positive_kernel,
        out_shape=jax.ShapeDtypeStruct((1, count), jnp.float32),
        input_output_aliases={0: 0},   # in-place parameter update
    )(lam2d)
    return out.reshape(count)


# ----------------------------- module wrapper --------------------------------

class Lambda:
    """JAX/Pallas port of the PyTorch Lambda module."""

    def __init__(self, count: int = 1):
        self.count = count
        # torch.nn.Parameter(torch.Tensor([0.0]*count)) -> zeros, float32
        self.lambda_ = jnp.zeros((count,), dtype=jnp.float32)

    def forward(self):
        # Pure identity on the parameter: returning it directly is strictly
        # faster than an HBM->VMEM->HBM copy kernel and keeps exact semantics.
        return self.lambda_

    def __call__(self):
        return self.forward()

    def get_mask(self, i, damp):
        idx = jnp.asarray(i, dtype=jnp.int32).reshape(1)
        return _get_mask_jit(self.lambda_, idx, jnp.asarray(damp, jnp.float32))

    def get_loss(self, i, damp, loss):
        idx = jnp.asarray(i, dtype=jnp.int32).reshape(1)
        return _get_loss_jit(self.lambda_, idx,
                             jnp.asarray(damp, jnp.float32),
                             jnp.asarray(loss, jnp.float32))

    def get_mask_and_loss(self, i, damp, loss):
        # Fused variant (typical usage reads the same damp for both).
        idx = jnp.asarray(i, dtype=jnp.int32).reshape(1)
        return _get_mask_and_loss_jit(self.lambda_, idx,
                                      jnp.asarray(damp, jnp.float32),
                                      jnp.asarray(loss, jnp.float32))

    def make_positive(self):
        self.lambda_ = _make_positive_jit(self.lambda_)
        return self.lambda_


# ------------------------------ main ----------------------------------------

if __name__ == "__main__":
    key = jax.random.PRNGKey(0)
    k_damp, k_loss, k_lam, k_damp2, k_loss2 = jax.random.split(key, 5)

    count = 4
    mod = Lambda(count=count)

    # --- forward(): must return the (zero-initialized) parameter exactly ---
    out = mod.forward()
    jax.block_until_ready(out)
    assert out.shape == (count,) and out.dtype == jnp.float32
    assert bool(jnp.allclose(out, jnp.zeros((count,), jnp.float32)))

    # --- small synthetic data (single-tile path) ---
    damp = jax.random.normal(k_damp, (8, 128), dtype=jnp.float32)
    loss = jax.random.normal(k_loss, (8, 128), dtype=jnp.float32)

    # give lambda_ non-trivial values (as if after some optimizer steps)
    mod.lambda_ = jax.random.normal(k_lam, (count,), dtype=jnp.float32)

    mask = mod.get_mask(1, damp)
    jax.block_until_ready(mask)
    ref_mask = 1.0 - (damp >= 0.0).astype(jnp.float32) * (
        mod.lambda_[1] <= damp
    ).astype(jnp.float32)
    assert bool(jnp.allclose(mask, ref_mask))

    lval = mod.get_loss(2, damp, loss)
    jax.block_until_ready(lval)
    ref_loss = (mod.lambda_[2] - damp) * loss
    assert bool(jnp.allclose(lval, ref_loss, atol=1e-6))

    fmask, floss = mod.get_mask_and_loss(3, damp, loss)
    jax.block_until_ready((fmask, floss))
    ref_fmask = 1.0 - (damp >= 0.0).astype(jnp.float32) * (
        mod.lambda_[3] <= damp
    ).astype(jnp.float32)
    ref_floss = (mod.lambda_[3] - damp) * loss
    assert bool(jnp.allclose(fmask, ref_fmask))
    assert bool(jnp.allclose(floss, ref_floss, atol=1e-6))

    # --- larger data to exercise the multi-tile grid path (2x2 grid) ---
    damp2 = jax.random.normal(k_damp2, (1024, 1024), dtype=jnp.float32)
    loss2 = jax.random.normal(k_loss2, (1024, 1024), dtype=jnp.float32)
    mask2, loss_out2 = mod.get_mask_and_loss(0, damp2, loss2)
    jax.block_until_ready((mask2, loss_out2))
    ref_mask2 = 1.0 - (damp2 >= 0.0).astype(jnp.float32) * (
        mod.lambda_[0] <= damp2
    ).astype(jnp.float32)
    ref_loss2 = (mod.lambda_[0] - damp2) * loss2
    assert bool(jnp.allclose(mask2, ref_mask2))
    assert bool(jnp.allclose(loss_out2, ref_loss2, atol=1e-5))

    # --- make_positive(): in-place clamp of negative lambdas to zero ---
    before = mod.lambda_
    after = mod.make_positive()
    jax.block_until_ready(after)
    ref_pos = before * (before > 0.0).astype(jnp.float32)
    assert bool(jnp.allclose(after, ref_pos))

    print("KERNEL_OK")
</pallas_src>

<mosaic_0001>
module attributes {stable_mosaic.version = 11 : i64} {
  func.func @_mask_kernel(%arg0: i32, %arg1: i32, %arg2: memref<1xi32, #tpu.memory_space<smem>>, %arg3: memref<4xf32, #tpu.memory_space<smem>>, %arg4: memref<8x128xf32, #tpu.memory_space<vmem>>, %arg5: memref<8x128xf32, #tpu.memory_space<vmem>>) attributes {dimension_semantics = [#tpu.dimension_semantics<parallel>, #tpu.dimension_semantics<parallel>], iteration_bounds = array<i64: 1, 1>, scalar_prefetch = 2 : i64, scratch_operands = 0 : i64, tpu.core_type = #tpu.core_type<tc>, window_params = [{transform_indices = @transform_0, window_bounds = array<i64: 8, 128>}, {transform_indices = @transform_1, window_bounds = array<i64: 8, 128>}]} {
    %c0 = arith.constant 0 : index
    %0 = memref.load %arg2[%c0] : memref<1xi32, #tpu.memory_space<smem>>
    %1 = arith.index_cast %0 : i32 to index
    %2 = memref.load %arg3[%1] : memref<4xf32, #tpu.memory_space<smem>>
    %c0_0 = arith.constant 0 : index
    %c0_1 = arith.constant 0 : index
    %3 = vector.load %arg4[%c0_0, %c0_1] : memref<8x128xf32, #tpu.memory_space<vmem>>, vector<8x128xf32>
    %cst = arith.constant 0.000000e+00 : f32
    %4 = vector.broadcast %cst : f32 to vector<8x128xf32>
    %5 = arith.cmpf oge, %3, %4 : vector<8x128xf32>
    %6 = vector.broadcast %2 : f32 to vector<8x128xf32>
    %7 = arith.cmpf ole, %6, %3 : vector<8x128xf32>
    %8 = arith.andi %5, %7 : vector<8x128xi1>
    %cst_2 = arith.constant 0.000000e+00 : f32
    %cst_3 = arith.constant 1.000000e+00 : f32
    %9 = vector.broadcast %cst_2 : f32 to vector<8x128xf32>
    %10 = vector.broadcast %cst_3 : f32 to vector<8x128xf32>
    %11 = arith.select %8, %9, %10 : vector<8x128xi1>, vector<8x128xf32>
    %c0_4 = arith.constant 0 : index
    %c0_5 = arith.constant 0 : index
    %12 = vector.load %arg5[%c0_4, %c0_5] : memref<8x128xf32, #tpu.memory_space<vmem>>, vector<8x128xf32>
    tpu.vector_store %arg5[%c0_4, %c0_5], %11 {strides = array<i32>} : memref<8x128xf32, #tpu.memory_space<vmem>>, vector<8x128xf32>,
    return
  }
  func.func @transform_0(%arg0: i32, %arg1: i32, %arg2: memref<1xi32, #tpu.memory_space<smem>>, %arg3: memref<4xf32, #tpu.memory_space<smem>>) -> (i32, i32) {
    %c0_i32 = arith.constant 0 : i32
    return %arg0, %arg1 : i32, i32
  }
  func.func @transform_1(%arg0: i32, %arg1: i32, %arg2: memref<1xi32, #tpu.memory_space<smem>>, %arg3: memref<4xf32, #tpu.memory_space<smem>>) -> (i32, i32) {
    %c0_i32 = arith.constant 0 : i32
    return %arg0, %arg1 : i32, i32
  }
}

</mosaic_0001>

<llo_original>
// kernel: _get_mask_jit.1
$region0: #{_get_mask_jit.1}
  #allocation0 [shape = 'u32[]', space=smem, size = 0x4, offset = 0x4, fixed_abs, tag = 'smem constant byte address 0x4 - core index']
  #allocation1 [shape = 'u32[144,128]{1,0:T(1,128)}', space=vmem, size = 0x12000, scoped, tag = 'internal scratch']
  #allocation2 [shape = 's32[1]{0}', space=sflag, size = 0x4, scoped, tag = 'scoped memory for _get_mask_jit.1']
  #allocation3 [shape = 's32[1]{0:T(128)S(6)}', space=smem, size = 0x200, scoped, tag = 'prefetched SMEM operand 0']
  #allocation4 [shape = 'u8[512]{0}', space=smem, size = 0x200, scoped, tag = 'prefetched SMEM operand 1']
  %s0 = inlined_call_operand.<no memory space> [shape: s32[1], index: 0, kind: input, shape index: {}]
  %s1 = inlined_call_operand.vmem [shape: f32[4], index: 1, kind: input, shape index: {}]
  %s2 = inlined_call_operand.hbm [shape: f32[8,128], index: 2, kind: input, shape index: {}]
  %s3 = inlined_call_operand.hbm [shape: f32[8,128], index: 3, kind: output, shape index: {}]
  %s4 = sld [smem:[#allocation0]]
  $region18: #{_get_mask_jit.1} parent=0
    _
  %s6 = ssub.s32 1, %s4
  %s7 = scalar_select 0, %s6, %s4
  %8 = sst [smem:[#allocation3]] %s0
  %s9 = sshll.u32 %s1, 4
  %s10 = int_to_ptr.vmem [resolvable:$true] %s9
  %12 = dma.vmem_to_smem %s10, 16, [#allocation4], [#allocation2]
  %13 = dma.done [#allocation2], 16
  %14 = sfence
  $region1: #{_get_mask_jit.1} parent=0
    #allocation5 [shape = 'u8[4096]{0}', space=vmem, size = 0x1000, scoped, tag = 'input window, operand 2, single buffered']
    #allocation6 [shape = 's32[1]{0}', space=sflag, size = 0x4, scoped, tag = 'scoped memory for _get_mask_jit.1']
    #allocation7 [shape = 's32[1]{0}', space=sflag, size = 0x4, scoped, tag = 'scoped memory for _get_mask_jit.1']
    #allocation8 [shape = 'u8[4096]{0}', space=vmem, size = 0x1000, scoped, tag = 'output window, operand 0, single buffered']
    %15 = vsyncpa [#allocation6], 0
    %16 = vsyncpa [#allocation7], 0
    // Predicated region
    $region2: #{_get_mask_jit.1} parent=1 // pred_check
      _
    $region3: #{_get_mask_jit.1} parent=1 // pred_check_branch
      %18 = sbr.rel (0) target = $region5
    $region4: #{_get_mask_jit.1} parent=1 // pred_region
      %s20 = ssub.s32 128, 128
      %21 = vsyncadd [#allocation6], %s20
      %s23 = sshll.u32 [#allocation5], 4
      %s24 = int_to_ptr.vmem [resolvable:$true] %s23
      %26 = dma.hbm_to_vmem [thread:$0]  %s2, 128, %s24, [#allocation6]
    $region5: #{_get_mask_jit.1} parent=1 // pred_fallthru
      _
    // Predicated region
    $region6: #{_get_mask_jit.1} parent=1 // pred_check
      _
    $region7: #{_get_mask_jit.1} parent=1 // pred_check_branch
      %28 = sbr.rel (0) target = $region9
    $region8: #{_get_mask_jit.1} parent=1 // pred_region
      %29 = dma.done [#allocation6], 128
    $region9: #{_get_mask_jit.1} parent=1 // pred_fallthru
      _
    %s30 = sld [smem:[#allocation3]]
    %s31 = sld [smem:[#allocation4 + %s30]]
    %v32 = vld [vmem:[#allocation5] sm:$0xff]
    %vm33 = vcmp.ge.f32.partialorder %v32, 0.0
    %v34 = vstv %s31
    %vm35 = vcmp.le.f32.partialorder %v34, %v32
    %vm36 = vmand %vm33, %vm35
    %v37 = vsel %vm36, 0.0, 1.0
    %38 = vst [vmem:[#allocation8] sm:$0xff] %v37
    // Predicated region
    $region10: #{_get_mask_jit.1} parent=1 // pred_check
      _
    $region11: #{_get_mask_jit.1} parent=1 // pred_check_branch
      %40 = sbr.rel (0) target = $region13
    $region12: #{_get_mask_jit.1} parent=1 // pred_region
      %s42 = ssub.s32 128, 128
      %43 = vsyncadd [#allocation7], %s42
      %s45 = sshll.u32 [#allocation8], 4
      %s46 = int_to_ptr.vmem [resolvable:$true] %s45
      %48 = dma.vmem_to_hbm [thread:$0]  %s46, 128, %s3, [#allocation7]
    $region13: #{_get_mask_jit.1} parent=1 // pred_fallthru
      _
    // Predicated region
    $region14: #{_get_mask_jit.1} parent=1 // pred_check
      _
    $region15: #{_get_mask_jit.1} parent=1 // pred_check_branch
      %50 = sbr.rel (0) target = $region17
    $region16: #{_get_mask_jit.1} parent=1 // pred_region
      %51 = dma.done [#allocation7], 128
    $region17: #{_get_mask_jit.1} parent=1 // pred_fallthru
      _
    %52 = vsyncpa [#allocation6], 1
    %53 = vsyncpa [#allocation7], 1

</llo_original>
